<compile_context>
chip_gen: v5e
topology: v5e:2x2
jax: 0.10.0
libtpu: 0.0.40
codegen_flags: <defaults>
</compile_context>

<pallas_src>
import math

import jax
import jax.numpy as jnp
from jax.experimental import pallas as pl
from jax.experimental.pallas import tpu as pltpu


def _add_enc_kernel(x_ref, enc_ref, o_ref):
    # x_ref:   (1, C, tT) VMEM tile of the input
    # enc_ref: (1, C, 1)  per-batch encoding, broadcast over the time axis
    # o_ref:   (1, C, tT) output tile (aliased onto x in HBM)
    o_ref[...] = (x_ref[...].astype(jnp.float32) + enc_ref[...]).astype(o_ref.dtype)


def _choose_time_tile(C, T, itemsize, target_block_bytes=2 << 20):
    """Largest lane-dense (multiple-of-128) time tile with block <= ~2 MiB."""
    tT = (target_block_bytes // (C * itemsize)) // 128 * 128
    tT = max(tT, 128)
    if tT >= T:
        return T          # single full-T block (legal: equals the array dim)
    return tT


def positional_encoding(x, noise_level):
    """WaveGrad PositionalEncoding forward.

    x: [N, C, T] float32, noise_level: [N] float32 -> [N, C, T] float32.
    """
    if noise_level.ndim > 1:
        noise_level = jnp.squeeze(noise_level)
    N, C, T = x.shape
    assert C % 2 == 0, "PositionalEncoding requires an even channel count"
    count = C // 2

    # Tiny N x C encoding, kept in float32 regardless of x.dtype.
    step = jnp.arange(count, dtype=jnp.float32) / count
    half = noise_level.astype(jnp.float32)[:, None] * jnp.exp(
        -math.log(10000.0) * step[None, :])
    enc = jnp.concatenate([jnp.sin(half), jnp.cos(half)], axis=-1)  # (N, C)
    enc = enc[:, :, None]                                           # (N, C, 1)

    itemsize = jnp.dtype(x.dtype).itemsize
    tT = _choose_time_tile(C, T, itemsize)
    grid = (N, pl.cdiv(T, tT))

    cost = pl.CostEstimate(
        flops=N * C * T,
        transcendentals=0,
        bytes_accessed=2 * N * C * T * itemsize + N * C * 4,
    )

    return pl.pallas_call(
        _add_enc_kernel,
        out_shape=jax.ShapeDtypeStruct((N, C, T), x.dtype),
        grid_spec=pltpu.PrefetchScalarGridSpec(
            num_scalar_prefetch=0,
            grid=grid,
            in_specs=[
                pl.BlockSpec((1, C, tT), lambda n, t: (n, 0, t)),
                pl.BlockSpec((1, C, 1), lambda n, t: (n, 0, 0)),
            ],
            out_specs=pl.BlockSpec((1, C, tT), lambda n, t: (n, 0, t)),
        ),
        compiler_params=pltpu.CompilerParams(
            dimension_semantics=("parallel", "parallel"),
            vmem_limit_bytes=32 << 20,
        ),
        input_output_aliases={0: 0},   # in-place add over x
        cost_estimate=cost,
    )(x, enc)


def _reference(x, noise_level, dim):
    # pure-JAX reference mirroring the PyTorch module (math kept in f32)
    count = dim // 2
    step = jnp.arange(count, dtype=jnp.float32) / count
    encoding = noise_level.astype(jnp.float32)[:, None] * jnp.exp(
        -math.log(10000.0) * step[None, :])
    encoding = jnp.concatenate([jnp.sin(encoding), jnp.cos(encoding)], axis=-1)
    return (x.astype(jnp.float32) + encoding[:, :, None]).astype(x.dtype)


if __name__ == "__main__":
    key = jax.random.PRNGKey(0)
    k1, k2, k3, k4 = jax.random.split(key, 4)

    # Case 1: small shapes matching the module docstring ([N, C, T]).
    N, C, T = 2, 32, 16
    x = jax.random.normal(k1, (N, C, T), dtype=jnp.float32)
    noise = jax.random.uniform(k2, (N,), dtype=jnp.float32)
    ref = _reference(x, noise, C)            # reference first (output aliases x)
    out = positional_encoding(x, noise)
    jax.block_until_ready(out)
    assert out.shape == (N, C, T)
    assert out.dtype == jnp.float32
    assert jnp.allclose(out, ref, atol=1e-5, rtol=1e-5)

    # Case 2: lane-dense shape that exercises the T-tiled grid (tT = 1024).
    N2, C2, T2 = 1, 512, 2048
    x2 = jax.random.normal(k3, (N2, C2, T2), dtype=jnp.float32)
    noise2 = jax.random.uniform(k4, (N2,), dtype=jnp.float32)
    ref2 = _reference(x2, noise2, C2)
    out2 = positional_encoding(x2, noise2)
    jax.block_until_ready(out2)
    assert jnp.allclose(out2, ref2, atol=1e-5, rtol=1e-5)

    print("KERNEL_OK")
</pallas_src>

<mosaic_0001>
module attributes {stable_mosaic.version = 11 : i64} {
  func.func @_add_enc_kernel(%arg0: i32, %arg1: i32, %arg2: memref<1x32x16xf32, #tpu.memory_space<vmem>>, %arg3: memref<1x32x1xf32, #tpu.memory_space<vmem>>, %arg4: memref<1x32x16xf32, #tpu.memory_space<vmem>>) attributes {dimension_semantics = [#tpu.dimension_semantics<parallel>, #tpu.dimension_semantics<parallel>], iteration_bounds = array<i64: 2, 1>, scalar_prefetch = 0 : i64, scratch_operands = 0 : i64, tpu.core_type = #tpu.core_type<tc>, window_params = [{transform_indices = @transform_0, window_bounds = array<i64: 1, 32, 16>}, {transform_indices = @transform_1, window_bounds = array<i64: 1, 32, 1>}, {transform_indices = @transform_2, window_bounds = array<i64: 1, 32, 16>}]} {
    %c0 = arith.constant 0 : index
    %c0_0 = arith.constant 0 : index
    %c0_1 = arith.constant 0 : index
    %0 = vector.load %arg2[%c0, %c0_0, %c0_1] : memref<1x32x16xf32, #tpu.memory_space<vmem>>, vector<1x32x16xf32>
    %c0_2 = arith.constant 0 : index
    %c0_3 = arith.constant 0 : index
    %c0_4 = arith.constant 0 : index
    %1 = vector.load %arg3[%c0_2, %c0_3, %c0_4] : memref<1x32x1xf32, #tpu.memory_space<vmem>>, vector<1x32x1xf32>
    %2 = vector.broadcast %1 : vector<1x32x1xf32> to vector<1x32x16xf32>
    %3 = arith.addf %0, %2 : vector<1x32x16xf32>
    %c0_5 = arith.constant 0 : index
    %c0_6 = arith.constant 0 : index
    %c0_7 = arith.constant 0 : index
    %4 = vector.load %arg4[%c0_5, %c0_6, %c0_7] : memref<1x32x16xf32, #tpu.memory_space<vmem>>, vector<1x32x16xf32>
    tpu.vector_store %arg4[%c0_5, %c0_6, %c0_7], %3 {strides = array<i32>} : memref<1x32x16xf32, #tpu.memory_space<vmem>>, vector<1x32x16xf32>,
    return
  }
  func.func @transform_0(%arg0: i32, %arg1: i32) -> (i32, i32, i32) {
    %c0_i32 = arith.constant 0 : i32
    %c0_i32_0 = arith.constant 0 : i32
    return %arg0, %c0_i32, %arg1 : i32, i32, i32
  }
  func.func @transform_1(%arg0: i32, %arg1: i32) -> (i32, i32, i32) {
    %c0_i32 = arith.constant 0 : i32
    %c0_i32_0 = arith.constant 0 : i32
    %c0_i32_1 = arith.constant 0 : i32
    return %arg0, %c0_i32, %c0_i32_0 : i32, i32, i32
  }
  func.func @transform_2(%arg0: i32, %arg1: i32) -> (i32, i32, i32) {
    %c0_i32 = arith.constant 0 : i32
    %c0_i32_0 = arith.constant 0 : i32
    return %arg0, %c0_i32, %arg1 : i32, i32, i32
  }
}

</mosaic_0001>

<llo_original>
// kernel: tpu_custom_call.1
$region0: #{tpu_custom_call.1}
  #allocation0 [shape = 'u32[]', space=smem, size = 0x4, offset = 0x4, fixed_abs, tag = 'smem constant byte address 0x4 - core index']
  #allocation1 [shape = 'u32[72,128]{1,0:T(1,128)}', space=vmem, size = 0x9000, scoped, tag = 'internal scratch']
  %s0 = inlined_call_operand.vmem [shape: f32[2,32,16], index: 0, kind: input, shape index: {}, may-alias: {0,2}]
  %s1 = inlined_call_operand.vmem [shape: f32[2,32,1], index: 1, kind: input, shape index: {}]
  %s2 = inlined_call_operand.vmem [shape: f32[2,32,16], index: 2, kind: output, shape index: {}, may-alias: {0,2}]
  %s3 = sld [smem:[#allocation0]]
  $region41: #{tpu_custom_call.1} parent=0
    _
  %s5 = ssub.s32 1, %s3
  %s6 = scalar_select 0, %s5, %s3
  loop: start=0, step=1, limit=4
  $region2: #{tpu_custom_call.1} parent=0 // loop_pre_header
    _
  $region3: #{tpu_custom_call.1} parent=0 // loop_header
    %s8 = sphi 0, %s12
    %p9 = scmp.ge.s32.totalorder %s8, 4
    %s15 = sphi 0, %s27
    %s16 = sphi 0, %s23
    %s17 = sphi 0, %s15
    %s18 = sphi 0, %s16
    %s19 = sphi 0, %s17
    %s20 = sphi 0, %s18
    %s32 = sphi 0, %s34
    %s35 = sphi 0, %s32
    %s36 = sphi 0, %s35
    %s52 = sphi 0, %s36
    %s58 = sphi 0, %s60
    %s61 = sphi 0, %s58
    %s62 = sphi 0, %s61
    %s78 = sphi 0, %s62
    %s86 = sphi 0, %s88
    %s89 = sphi 0, %s86
    %s90 = sphi 0, %s89
    %s106 = sphi 0, %s90
  $region4: #{tpu_custom_call.1} parent=0 // loop_header_branch
    %11 = sbr.rel (%p9) target = $region8
  $region5: #{tpu_custom_call.1} parent=0 // loop_body
    %s13 = ssub.s32 %s8, 1
    %s14 = ssub.s32 %s8, 2
    %s21 = sadd.s32 1, %s16
    %p22 = scmp.ge.s32.totalorder %s21, 1
    %s23 = scalar_select %p22, 0, %s21
    %s24 = sadd.s32 1, %s15
    %s25 = scalar_select %p22, %s24, %s15
    %p26 = scmp.ge.s32.totalorder %s25, 2
    %s27 = scalar_select %p26, 0, %s25
    %s28 = ssub.s32 %s15, %s27
    %s29 = ssub.s32 %s16, %s23
    %s30 = sor.u32 %s28, %s29
    %p31 = scmp.eq.s32.totalorder %s30, 0
    %s33 = sadd.s32 %s32, 1
    %s34 = scalar_select %p31, %s32, %s33
    %p37 = pneg %p31
    %p38 = scmp.eq.s32.totalorder %s8, 1
    %p39 = por %p37, %p38
    %p40 = scmp.ne.s32.totalorder %s32, %s35
    %p41 = scmp.eq.s32.totalorder %s8, 0
    %p42 = por %p40, %p41
    %p43 = scmp.ne.s32.totalorder %s32, %s35
    %p44 = scmp.eq.s32.totalorder %s13, 1
    %p45 = por %p43, %p44
    %p46 = scmp.ne.s32.totalorder %s35, %s36
    %p47 = scmp.eq.s32.totalorder %s13, 0
    %p48 = por %p46, %p47
    %p49 = scmp.ne.s32.totalorder %s35, %s36
    %p50 = scmp.eq.s32.totalorder %s14, 1
    %p51 = por %p49, %p50
    %p53 = scmp.ne.s32.totalorder %s36, %s52
    %p54 = scmp.eq.s32.totalorder %s14, 0
    %p55 = por %p53, %p54
    %s56 = ssub.s32 %s15, %s27
    %p57 = scmp.eq.s32.totalorder %s56, 0
    %s59 = sadd.s32 %s58, 1
    %s60 = scalar_select %p57, %s58, %s59
    %p63 = pneg %p57
    %p64 = scmp.eq.s32.totalorder %s8, 1
    %p65 = por %p63, %p64
    %p66 = scmp.ne.s32.totalorder %s58, %s61
    %p67 = scmp.eq.s32.totalorder %s8, 0
    %p68 = por %p66, %p67
    %p69 = scmp.ne.s32.totalorder %s58, %s61
    %p70 = scmp.eq.s32.totalorder %s13, 1
    %p71 = por %p69, %p70
    %p72 = scmp.ne.s32.totalorder %s61, %s62
    %p73 = scmp.eq.s32.totalorder %s13, 0
    %p74 = por %p72, %p73
    %p75 = scmp.ne.s32.totalorder %s61, %s62
    %p76 = scmp.eq.s32.totalorder %s14, 1
    %p77 = por %p75, %p76
    %p79 = scmp.ne.s32.totalorder %s62, %s78
    %p80 = scmp.eq.s32.totalorder %s14, 0
    %p81 = por %p79, %p80
    %s82 = ssub.s32 %s15, %s27
    %s83 = ssub.s32 %s16, %s23
    %s84 = sor.u32 %s82, %s83
    %p85 = scmp.eq.s32.totalorder %s84, 0
    %s87 = sadd.s32 %s86, 1
    %s88 = scalar_select %p85, %s86, %s87
    %p91 = pneg %p85
    %p92 = scmp.eq.s32.totalorder %s8, 1
    %p93 = por %p91, %p92
    %p94 = scmp.ne.s32.totalorder %s86, %s89
    %p95 = scmp.eq.s32.totalorder %s8, 0
    %p96 = por %p94, %p95
    %p97 = scmp.ne.s32.totalorder %s86, %s89
    %p98 = scmp.eq.s32.totalorder %s13, 1
    %p99 = por %p97, %p98
    %p100 = scmp.ne.s32.totalorder %s89, %s90
    %p101 = scmp.eq.s32.totalorder %s13, 0
    %p102 = por %p100, %p101
    %p103 = scmp.ne.s32.totalorder %s89, %s90
    %p104 = scmp.eq.s32.totalorder %s14, 1
    %p105 = por %p103, %p104
    %p107 = scmp.ne.s32.totalorder %s90, %s106
    %p108 = scmp.eq.s32.totalorder %s14, 0
    %p109 = por %p107, %p108
    %p110 = scmp.le.s32.totalorder 1, %s8
    %p111 = scmp.lt.s32.totalorder %s8, 3
    %p112 = pnand %p110, %p111
    %p113 = pneg %p112
    // Predicated region
    $region9: #{tpu_custom_call.1} parent=5 // pred_check
      _
    $region10: #{tpu_custom_call.1} parent=5 // pred_check_branch
      %115 = sbr.rel (%p112) target = $region12
    $region11: #{tpu_custom_call.1} parent=5 // pred_region
      %s116 = ssub.s32 %s8, 1
    $region12: #{tpu_custom_call.1} parent=5 // pred_fallthru
      _
    %p117 = scmp.lt.s32.totalorder %s8, 2
    // Predicated region
    $region13: #{tpu_custom_call.1} parent=5 // pred_check
      %p118 = pneg %p117
    $region14: #{tpu_custom_call.1} parent=5 // pred_check_branch
      %120 = sbr.rel (%p118) target = $region16
    $region15: #{tpu_custom_call.1} parent=5 // pred_region
      // Predicated region
      $region17: #{tpu_custom_call.1} parent=15 // pred_check
        %p121 = pneg %p42
      $region18: #{tpu_custom_call.1} parent=15 // pred_check_branch
        %123 = sbr.rel (%p121) target = $region20
      $region19: #{tpu_custom_call.1} parent=15 // pred_region
        %p124 = scmp.lt.s32.totalorder %s15, 1
        %s125 = scalar_select %p124, %s15, 1
        %p126 = scmp.lt.s32.totalorder %s16, 0
        %s127 = scalar_select %p126, %s16, 0
        %s128 = smul.addr %s125, 4
        %s129 = sadd.s32 %s127, %s128
        %s130 = smul.addr %s129, 8
        %s131 = scalar_lea.vmem %s0, %s130
      $region20: #{tpu_custom_call.1} parent=15 // pred_fallthru
        _
      // Predicated region
      $region21: #{tpu_custom_call.1} parent=15 // pred_check
        %p132 = pneg %p68
      $region22: #{tpu_custom_call.1} parent=15 // pred_check_branch
        %134 = sbr.rel (%p132) target = $region24
      $region23: #{tpu_custom_call.1} parent=15 // pred_region
        %p135 = scmp.lt.s32.totalorder %s15, 1
        %s136 = scalar_select %p135, %s15, 1
        %s137 = smul.addr %s136, 4
        %s138 = smul.addr %s137, 8
        %s139 = scalar_lea.vmem %s1, %s138
      $region24: #{tpu_custom_call.1} parent=15 // pred_fallthru
        _
    $region16: #{tpu_custom_call.1} parent=5 // pred_fallthru
      _
    %p140 = scmp.le.s32.totalorder 1, %s8
    %p141 = scmp.lt.s32.totalorder %s8, 3
    %p142 = pnand %p140, %p141
    %p143 = pneg %p142
    // Predicated region
    $region25: #{tpu_custom_call.1} parent=5 // pred_check
      _
    $region26: #{tpu_custom_call.1} parent=5 // pred_check_branch
      %145 = sbr.rel (%p142) target = $region28
    $region27: #{tpu_custom_call.1} parent=5 // pred_region
      %s146 = ssub.s32 %s8, 1
      %p147 = scmp.lt.s32.totalorder %s17, 1
      %s148 = scalar_select %p147, %s17, 1
      %p149 = scmp.lt.s32.totalorder %s18, 0
      %s150 = scalar_select %p149, %s18, 0
      %s151 = smul.addr %s148, 4
      %s152 = sadd.s32 %s150, %s151
      %s153 = smul.addr %s152, 8
      %s154 = scalar_lea.vmem %s0, %s153
      %p155 = pneg %p48
      %p156 = pneg %p45
      %p157 = scmp.lt.s32.totalorder %s17, 1
      %s158 = scalar_select %p157, %s17, 1
      %s159 = smul.addr %s158, 4
      %s160 = smul.addr %s159, 8
      %s161 = scalar_lea.vmem %s1, %s160
      %p162 = pneg %p74
      %p163 = pneg %p71
      %p164 = pneg %p102
      %p165 = pneg %p99
      %p166 = scmp.lt.s32.totalorder %s17, 1
      %s167 = scalar_select %p166, %s17, 1
      %p168 = scmp.lt.s32.totalorder %s18, 0
      %s169 = scalar_select %p168, %s18, 0
      %s170 = smul.addr %s167, 4
      %s171 = sadd.s32 %s169, %s170
      %s172 = smul.addr %s171, 8
      %s173 = scalar_lea.vmem %s2, %s172
      %p174 = scmp.lt.s32.totalorder %s17, 1
      %s175 = scalar_select %p174, %s17, 1
      %p176 = scmp.lt.s32.totalorder %s18, 0
      %s177 = scalar_select %p176, %s18, 0
      %s178 = smul.addr %s175, 4
      %s179 = sadd.s32 %s177, %s178
      %s180 = smul.addr %s179, 8
      %s181 = scalar_lea.vmem %s0, %s180
      %p182 = scmp.lt.s32.totalorder %s17, 1
      %s183 = scalar_select %p182, %s17, 1
      %s184 = smul.addr %s183, 4
      %s185 = smul.addr %s184, 8
      %s186 = scalar_lea.vmem %s1, %s185
      %p187 = scmp.lt.s32.totalorder %s17, 1
      %s188 = scalar_select %p187, %s17, 1
      %p189 = scmp.lt.s32.totalorder %s18, 0
      %s190 = scalar_select %p189, %s18, 0
      %s191 = smul.addr %s188, 4
      %s192 = sadd.s32 %s190, %s191
      %s193 = smul.addr %s192, 8
      %s194 = scalar_lea.vmem %s2, %s193
      %v195 = vld [vmem:[%s181] sm:$0xff]
      %v196 = vld [vmem:[%s181 + $0x8] sm:$0xff]
      %v197 = vld [vmem:[%s181 + $0x10] sm:$0xff]
      %v198 = vld [vmem:[%s181 + $0x18] sm:$0xff]
      %v199 = vld [vmem:[%s186] sm:$0xff]
      %v200 = vld [vmem:[%s186 + $0x8] sm:$0xff]
      %v201 = vld [vmem:[%s186 + $0x10] sm:$0xff]
      %v202 = vld [vmem:[%s186 + $0x18] sm:$0xff]
      %204 = vset.pattern.permute.xlu0 0
      %205 = vperm.xlu0 %204, %v199
      %v206 = vpop.permute.xlu0 %205
      %209 = vset.pattern.permute.xlu0 0
      %210 = vperm.xlu0 %209, %v200
      %v211 = vpop.permute.xlu0 %210
      %214 = vset.pattern.permute.xlu0 0
      %215 = vperm.xlu0 %214, %v201
      %v216 = vpop.permute.xlu0 %215
      %219 = vset.pattern.permute.xlu0 0
      %220 = vperm.xlu0 %219, %v202
      %v221 = vpop.permute.xlu0 %220
      %v223 = vadd.f32 %v195, %v206
      %v224 = vadd.f32 %v196, %v211
      %v225 = vadd.f32 %v197, %v216
      %v226 = vadd.f32 %v198, %v221
      %vm227 = vcmask 130048
      %228 = vst.msk [vmem:[%s194] sm:$0xff] %vm227, %v223
      %229 = vst.msk [vmem:[%s194 + $0x8] sm:$0xff] %vm227, %v224
      %230 = vst.msk [vmem:[%s194 + $0x10] sm:$0xff] %vm227, %v225
      %231 = vst.msk [vmem:[%s194 + $0x18] sm:$0xff] %vm227, %v226
      %p232 = scmp.lt.s32.totalorder %s17, 1
      %s233 = scalar_select %p232, %s17, 1
      %p234 = scmp.lt.s32.totalorder %s18, 0
      %s235 = scalar_select %p234, %s18, 0
      %s236 = smul.addr %s233, 4
      %s237 = sadd.s32 %s235, %s236
      %s238 = smul.addr %s237, 8
      %s239 = scalar_lea.vmem %s2, %s238
      // Predicated region
      $region29: #{tpu_custom_call.1} parent=27 // pred_check
        %p240 = pneg %p99
      $region30: #{tpu_custom_call.1} parent=27 // pred_check_branch
        %242 = sbr.rel (%p240) target = $region32
      $region31: #{tpu_custom_call.1} parent=27 // pred_region
        _
      $region32: #{tpu_custom_call.1} parent=27 // pred_fallthru
        _
    $region28: #{tpu_custom_call.1} parent=5 // pred_fallthru
      _
    %p243 = scmp.le.s32.totalorder 2, %s8
    // Predicated region
    $region33: #{tpu_custom_call.1} parent=5 // pred_check
      %p244 = pneg %p243
    $region34: #{tpu_custom_call.1} parent=5 // pred_check_branch
      %246 = sbr.rel (%p244) target = $region36
    $region35: #{tpu_custom_call.1} parent=5 // pred_region
      %s247 = ssub.s32 %s8, 2
      // Predicated region
      $region37: #{tpu_custom_call.1} parent=35 // pred_check
        %p248 = pneg %p105
      $region38: #{tpu_custom_call.1} parent=35 // pred_check_branch
        %250 = sbr.rel (%p248) target = $region40
      $region39: #{tpu_custom_call.1} parent=35 // pred_region
        %p251 = scmp.lt.s32.totalorder %s19, 1
        %s252 = scalar_select %p251, %s19, 1
        %p253 = scmp.lt.s32.totalorder %s20, 0
        %s254 = scalar_select %p253, %s20, 0
        %s255 = smul.addr %s252, 4
        %s256 = sadd.s32 %s254, %s255
        %s257 = smul.addr %s256, 8
        %s258 = scalar_lea.vmem %s2, %s257
      $region40: #{tpu_custom_call.1} parent=35 // pred_fallthru
        _
    $region36: #{tpu_custom_call.1} parent=5 // pred_fallthru
      _
  $region6: #{tpu_custom_call.1} parent=0 // loop_footer
    %s12 = sadd.s32 1, %s8
  $region7: #{tpu_custom_call.1} parent=0 // loop_footer_branch
    %7 = sbr.rel target = $region3
  $region8: #{tpu_custom_call.1} parent=0 // loop_exit
    _

</llo_original>
